<compile_context>
chip_gen: v7x
topology: tpu7x:2x2x1
jax: 0.10.0
libtpu: 0.0.40
codegen_flags: <defaults>
</compile_context>

<pallas_src>
import functools

import jax
import jax.numpy as jnp
from jax.experimental import pallas as pl
from jax.experimental.pallas import tpu as pltpu

_MIN_ROWS = 8  # sublane granule


# --------------------------------------------------------------------------
# Kernels
# --------------------------------------------------------------------------
def _highway_gate_kernel(x_ref, y_ref, w_ref, b_ref, o_ref):
    # x_ref, y_ref, o_ref: (TM, H); w_ref: (H_in, H_out) pre-transposed
    # (VMEM-resident, single-buffered); b_ref: (1, H) f32 (resident).
    x = x_ref[...]
    y = y_ref[...]

    # z = x @ W^T + b.  Weight arrives already as (K, N) so the MXU consumes
    # it with no per-step relayout; f32 accumulator.
    z = jnp.dot(x, w_ref[...], preferred_element_type=jnp.float32)
    t = jax.nn.sigmoid(z + b_ref[...])                     # (TM, H) f32

    # out = t*x + (1-t)*y == y + t*(x - y); diff in input dtype, one cast.
    d = (x - y).astype(jnp.float32)
    o_ref[...] = (y.astype(jnp.float32) + t * d).astype(o_ref.dtype)


def _highway_gate_kernel_blocked(x_ref, y_ref, w_ref, b_ref, o_ref):
    # Feature-blocked fallback for weights too large to stay VMEM-resident.
    # x_ref: (TM, H) full-width LHS; w_ref: (H, TN) column block of W^T;
    # y_ref, o_ref: (TM, TN); b_ref: (1, TN) f32.
    tn = o_ref.shape[-1]
    j = pl.program_id(1)

    x = x_ref[...]                                          # (TM, H)
    z = jnp.dot(x, w_ref[...], preferred_element_type=jnp.float32)  # (TM, TN)
    t = jax.nn.sigmoid(z + b_ref[...])

    col0 = pl.multiple_of(j * tn, tn)
    xs = x_ref[:, pl.ds(col0, tn)]                          # matching x columns
    ys = y_ref[...]
    d = (xs - ys).astype(jnp.float32)
    o_ref[...] = (ys.astype(jnp.float32) + t * d).astype(o_ref.dtype)


# --------------------------------------------------------------------------
# Tiling / budgeting helpers (all static Python)
# --------------------------------------------------------------------------
def _round_up(v, m):
    return ((v + m - 1) // m) * m


def _vmem_budget_bytes():
    # Generation-aware VMEM limit: ~7/8 of physical capacity (112 MiB on
    # v5e/v6e, 56 MiB on v7x), leaving headroom for Mosaic internal scratch.
    try:
        cap = int(pltpu.get_tpu_info().vmem_capacity_bytes)
    except Exception:
        cap = 64 * 1024 * 1024
    return (cap * 7) // 8


def _pick_row_tile(m, h, stream_itemsize, resident_bytes, budget):
    """Largest row tile (multiple of 8, <= 1024) whose double-buffered
    x/y/out streams plus f32 epilogue temps fit the remaining budget.
    Guarantees >= 2 grid steps when possible (both v7x TensorCores busy)."""
    avail = max(budget - resident_bytes, 0)
    # 3 streams x 2 buffers in input dtype + ~3 full-width f32 temps (z/t/blend)
    per_row = 3 * 2 * h * stream_itemsize + 3 * h * 4
    tm = max(_MIN_ROWS, (avail // max(per_row, 1)) // _MIN_ROWS * _MIN_ROWS)
    tm = min(tm, 1024)
    if m <= tm:
        tm = _round_up(-(-m // 2), _MIN_ROWS) if m > _MIN_ROWS else m
    return tm


def _pick_feature_tile(h, weight_itemsize, budget):
    """Largest multiple of 128 dividing H whose double-buffered (H, TN) weight
    slab uses at most half the budget."""
    for tn in (2048, 1024, 512, 256, 128):
        if tn <= h and h % tn == 0 and 2 * h * tn * weight_itemsize <= budget // 2:
            return tn
    return 128 if (h % 128 == 0 and h >= 128) else h


def _pick_row_tile_blocked(m, h, tn, stream_itemsize, weight_itemsize, budget):
    resident = 2 * h * tn * weight_itemsize + 2 * tn * 4   # weight + bias blocks
    avail = max(budget - resident, 0)
    per_row = (2 * h * stream_itemsize          # x (TM, H), double-buffered
               + 4 * tn * stream_itemsize       # y, out (TM, TN), double-buffered
               + 3 * tn * 4 + h * 4)            # f32 temps
    tm = max(_MIN_ROWS, (avail // max(per_row, 1)) // _MIN_ROWS * _MIN_ROWS)
    tm = min(tm, 512)
    if m <= tm:
        tm = _round_up(-(-m // 2), _MIN_ROWS) if m > _MIN_ROWS else m
    return tm


# --------------------------------------------------------------------------
# Wrapper
# --------------------------------------------------------------------------
@functools.partial(jax.jit, static_argnames=("feature_tile",))
def highway_gate(x, y, weight, bias, *, feature_tile=None):
    """x, y: (B, S, H); weight: (H, H) torch-style (out, in); bias: (H,).

    feature_tile: optional int forcing the feature-blocked (2-D grid) path.
    """
    B, S, H = x.shape
    M = B * S
    x2 = x.reshape(M, H)
    y2 = y.reshape(M, H)
    # One-time transpose to (K=H_in, N=H_out): MXU-native RHS layout; cost is
    # H^2 bytes once vs streaming 3*M*H, negligible.
    w_t = weight.T
    b2 = bias.astype(jnp.float32).reshape(1, H)

    s_in = x.dtype.itemsize
    s_w = weight.dtype.itemsize
    budget = _vmem_budget_bytes()

    weight_bytes = H * H * s_w                       # single-buffered resident
    bias_bytes = H * 4
    min_stream = _MIN_ROWS * (3 * 2 * H * s_in + 3 * H * 4)
    use_blocked = feature_tile is not None or (
        weight_bytes + bias_bytes + min_stream > budget and H % 128 == 0)
    # NOTE: if H is not a multiple of 128 and the weight still doesn't fit,
    # we stay on the resident path and rely on the compiler (spill risk).

    cost = pl.CostEstimate(
        flops=2 * M * H * H,
        transcendentals=M * H,
        bytes_accessed=3 * M * H * s_in + H * H * s_w + H * 4)

    if not use_blocked:
        tm = _pick_row_tile(M, H, s_in, weight_bytes + bias_bytes, budget)
        grid = (pl.cdiv(M, tm),)
        out2 = pl.pallas_call(
            _highway_gate_kernel,
            out_shape=jax.ShapeDtypeStruct((M, H), x.dtype),
            grid=grid,
            in_specs=[
                pl.BlockSpec((tm, H), lambda i: (i, 0)),     # x stream
                pl.BlockSpec((tm, H), lambda i: (i, 0)),     # y stream
                pl.BlockSpec((H, H), lambda i: (0, 0),       # resident weight
                             pipeline_mode=pl.Buffered(1)),
                pl.BlockSpec((1, H), lambda i: (0, 0),       # resident bias
                             pipeline_mode=pl.Buffered(1)),
            ],
            out_specs=pl.BlockSpec((tm, H), lambda i: (i, 0)),
            compiler_params=pltpu.CompilerParams(
                dimension_semantics=("parallel",),
                vmem_limit_bytes=budget),
            cost_estimate=cost,
        )(x2, y2, w_t, b2)
    else:
        tn = feature_tile if feature_tile is not None else \
            _pick_feature_tile(H, s_w, budget)
        tm = _pick_row_tile_blocked(M, H, tn, s_in, s_w, budget)
        grid = (pl.cdiv(M, tm), pl.cdiv(H, tn))
        out2 = pl.pallas_call(
            _highway_gate_kernel_blocked,
            out_shape=jax.ShapeDtypeStruct((M, H), x.dtype),
            grid=grid,
            in_specs=[
                pl.BlockSpec((tm, H), lambda i, j: (i, 0)),   # full-width x
                pl.BlockSpec((tm, tn), lambda i, j: (i, j)),  # y block
                pl.BlockSpec((H, tn), lambda i, j: (0, j)),   # weight column block
                pl.BlockSpec((1, tn), lambda i, j: (0, j)),   # bias block
            ],
            out_specs=pl.BlockSpec((tm, tn), lambda i, j: (i, j)),
            compiler_params=pltpu.CompilerParams(
                dimension_semantics=("parallel", "arbitrary"),
                vmem_limit_bytes=budget),
            cost_estimate=cost,
        )(x2, y2, w_t, b2)

    return out2.reshape(B, S, H)


# --------------------------------------------------------------------------
# Reference + test
# --------------------------------------------------------------------------
def _reference(x, y, weight, bias):
    z = jnp.einsum("bsh,oh->bso", x, weight) + bias
    t = jax.nn.sigmoid(z)
    return t * x + (1.0 - t) * y


if __name__ == "__main__":
    def run_case(B, S, H, feature_tile=None, seed=0):
        key = jax.random.PRNGKey(seed)
        kx, ky, kw, kb = jax.random.split(key, 4)
        x = jax.random.normal(kx, (B, S, H), dtype=jnp.float32)
        y = jax.random.normal(ky, (B, S, H), dtype=jnp.float32)
        # Deterministic init mirroring nn.Linear(in_out_size, in_out_size).
        bound = 1.0 / (H ** 0.5)
        weight = jax.random.uniform(kw, (H, H), jnp.float32, -bound, bound)
        bias = jax.random.uniform(kb, (H,), jnp.float32, -bound, bound)

        out = highway_gate(x, y, weight, bias, feature_tile=feature_tile)
        jax.block_until_ready(out)
        ref = _reference(x, y, weight, bias)
        assert jnp.allclose(out, ref, atol=1e-5, rtol=1e-5), (
            f"mismatch vs reference (H={H}, feature_tile={feature_tile})")

    # Path A: resident single-buffered weight, 1-D row grid with >= 2 steps.
    run_case(2, 8, 32)
    # Path B: feature-blocked weight fallback, exercised at a small size.
    run_case(2, 8, 256, feature_tile=128)

    print("KERNEL_OK")
</pallas_src>

<mosaic_0001>
module attributes {stable_mosaic.version = 11 : i64} {
  func.func @_highway_gate_kernel(%arg0: i32, %arg1: memref<8x32xf32, #tpu.memory_space<vmem>>, %arg2: memref<8x32xf32, #tpu.memory_space<vmem>>, %arg3: memref<32x32xf32, #tpu.memory_space<vmem>>, %arg4: memref<1x32xf32, #tpu.memory_space<vmem>>, %arg5: memref<8x32xf32, #tpu.memory_space<vmem>>) attributes {dimension_semantics = [#tpu.dimension_semantics<parallel>], iteration_bounds = array<i64: 2>, scalar_prefetch = 0 : i64, scratch_operands = 0 : i64, tpu.core_type = #tpu.core_type<tc>, window_params = [{transform_indices = @transform_0, window_bounds = array<i64: 8, 32>}, {transform_indices = @transform_1, window_bounds = array<i64: 8, 32>}, {pipeline_mode = #tpu.pipeline_mode<synchronous>, transform_indices = @transform_2, window_bounds = array<i64: 32, 32>}, {pipeline_mode = #tpu.pipeline_mode<synchronous>, transform_indices = @transform_3, window_bounds = array<i64: 1, 32>}, {transform_indices = @transform_4, window_bounds = array<i64: 8, 32>}]} {
    %c0 = arith.constant 0 : index
    %c0_0 = arith.constant 0 : index
    %0 = vector.load %arg1[%c0, %c0_0] : memref<8x32xf32, #tpu.memory_space<vmem>>, vector<8x32xf32>
    %c0_1 = arith.constant 0 : index
    %c0_2 = arith.constant 0 : index
    %1 = vector.load %arg2[%c0_1, %c0_2] : memref<8x32xf32, #tpu.memory_space<vmem>>, vector<8x32xf32>
    %c0_3 = arith.constant 0 : index
    %c0_4 = arith.constant 0 : index
    %2 = vector.load %arg3[%c0_3, %c0_4] : memref<32x32xf32, #tpu.memory_space<vmem>>, vector<32x32xf32>
    %cst = arith.constant dense<0.000000e+00> : vector<8x32xf32>
    %3 = tpu.matmul %0, %2, %cst {dimension_numbers = #tpu.dot_dimension_numbers<[1], [0], [0], [1], [0, 0, 1, 1], [], []>} : vector<8x32xf32>, vector<32x32xf32>, vector<8x32xf32> -> vector<8x32xf32>
    %c0_5 = arith.constant 0 : index
    %c0_6 = arith.constant 0 : index
    %4 = vector.load %arg4[%c0_5, %c0_6] : memref<1x32xf32, #tpu.memory_space<vmem>>, vector<1x32xf32>
    %5 = vector.broadcast %4 : vector<1x32xf32> to vector<8x32xf32>
    %6 = arith.addf %3, %5 : vector<8x32xf32>
    %7 = arith.negf %6 : vector<8x32xf32>
    %8 = math.exp %7 : vector<8x32xf32>
    %cst_7 = arith.constant 1.000000e+00 : f32
    %9 = vector.broadcast %cst_7 : f32 to vector<8x32xf32>
    %10 = arith.addf %9, %8 : vector<8x32xf32>
    %11 = arith.divf %9, %10 : vector<8x32xf32>
    %12 = arith.subf %0, %1 : vector<8x32xf32>
    %13 = arith.mulf %11, %12 : vector<8x32xf32>
    %14 = arith.addf %1, %13 : vector<8x32xf32>
    %c0_8 = arith.constant 0 : index
    %c0_9 = arith.constant 0 : index
    %15 = vector.load %arg5[%c0_8, %c0_9] : memref<8x32xf32, #tpu.memory_space<vmem>>, vector<8x32xf32>
    tpu.vector_store %arg5[%c0_8, %c0_9], %14 {strides = array<i32>} : memref<8x32xf32, #tpu.memory_space<vmem>>, vector<8x32xf32>,
    return
  }
  func.func @transform_0(%arg0: i32) -> (i32, i32) {
    %c0_i32 = arith.constant 0 : i32
    %c0_i32_0 = arith.constant 0 : i32
    return %arg0, %c0_i32 : i32, i32
  }
  func.func @transform_1(%arg0: i32) -> (i32, i32) {
    %c0_i32 = arith.constant 0 : i32
    %c0_i32_0 = arith.constant 0 : i32
    return %arg0, %c0_i32 : i32, i32
  }
  func.func @transform_2(%arg0: i32) -> (i32, i32) {
    %c0_i32 = arith.constant 0 : i32
    %c0_i32_0 = arith.constant 0 : i32
    %c0_i32_1 = arith.constant 0 : i32
    return %c0_i32, %c0_i32_0 : i32, i32
  }
  func.func @transform_3(%arg0: i32) -> (i32, i32) {
    %c0_i32 = arith.constant 0 : i32
    %c0_i32_0 = arith.constant 0 : i32
    %c0_i32_1 = arith.constant 0 : i32
    return %c0_i32, %c0_i32_0 : i32, i32
  }
  func.func @transform_4(%arg0: i32) -> (i32, i32) {
    %c0_i32 = arith.constant 0 : i32
    %c0_i32_0 = arith.constant 0 : i32
    return %arg0, %c0_i32 : i32, i32
  }
}

</mosaic_0001>

<llo_original>
// kernel: highway_gate.1
$region0: #{highway_gate.1}
  #allocation0 [shape = 'u32[]', space=smem, size = 0x4, offset = 0x4, fixed_abs, tag = 'smem constant byte address 0x4 - core index']
  #allocation1 [shape = 'u32[144,128]{1,0:T(1,128)}', space=vmem, size = 0x12000, scoped, tag = 'internal scratch']
  %s0 = inlined_call_operand.vmem [shape: f32[16,32], index: 0, kind: input, shape index: {}]
  %s1 = inlined_call_operand.vmem [shape: f32[16,32], index: 1, kind: input, shape index: {}]
  %s2 = inlined_call_operand.vmem [shape: f32[32,32], index: 2, kind: input, shape index: {}]
  %s3 = inlined_call_operand.vmem [shape: f32[1,32], index: 3, kind: input, shape index: {}]
  %s4 = inlined_call_operand.hbm [shape: f32[16,32], index: 4, kind: output, shape index: {}]
  %s5 = sld [smem:[#allocation0]]
  $region49: #{highway_gate.1} parent=0
    _
  %s7 = ssub.s32 1, %s5
  %s8 = scalar_select 0, %s7, %s5
  $region1: #{highway_gate.1} parent=0
    #allocation2 [shape = 'u8[8192]{0}', space=vmem, size = 0x2000, scoped, tag = 'output window, operand 0']
    #allocation3 [shape = 's32[2]{0}', space=sflag, size = 0x8, scoped, tag = 'scoped memory for highway_gate.1']
    %9 = vsyncpa [#allocation3], 0
    %s10 = scalar_lea.sflag [#allocation3], 1
    %11 = vsyncpa %s10, 0
    loop: start=0, step=1, limit=4
    $region2: #{highway_gate.1} parent=1 // loop_pre_header
      _
    $region3: #{highway_gate.1} parent=1 // loop_header
      %s13 = sphi 0, %s17
      %p14 = scmp.ge.s32.totalorder %s13, 4
      %s23 = sphi 0, %s25
      %s26 = sphi 0, %s23
      %s27 = sphi 0, %s26
      %s43 = sphi 0, %s27
      %s49 = sphi 0, %s51
      %s52 = sphi 0, %s49
      %s53 = sphi 0, %s52
      %s69 = sphi 0, %s53
      %s73 = sphi 0, %s73
      %s75 = sphi 0, %s73
      %s76 = sphi 0, %s75
      %s90 = sphi 0, %s76
      %s94 = sphi 0, %s94
      %s96 = sphi 0, %s94
      %s97 = sphi 0, %s96
      %s111 = sphi 0, %s97
      %s117 = sphi 0, %s119
      %s120 = sphi 0, %s117
      %s121 = sphi 0, %s120
      %s137 = sphi 0, %s121
    $region4: #{highway_gate.1} parent=1 // loop_header_branch
      %16 = sbr.rel (%p14) target = $region8
    $region5: #{highway_gate.1} parent=1 // loop_body
      %s18 = ssub.s32 %s13, 1
      %s19 = ssub.s32 %s13, 2
      %s20 = sadd.s32 %s13, 1
      %s21 = ssub.s32 %s13, %s20
      %p22 = scmp.eq.s32.totalorder %s21, 0
      %s24 = sadd.s32 %s23, 1
      %s25 = scalar_select %p22, %s23, %s24
      %p28 = pneg %p22
      %p29 = scmp.eq.s32.totalorder %s13, 1
      %p30 = por %p28, %p29
      %p31 = scmp.ne.s32.totalorder %s23, %s26
      %p32 = scmp.eq.s32.totalorder %s13, 0
      %p33 = por %p31, %p32
      %p34 = scmp.ne.s32.totalorder %s23, %s26
      %p35 = scmp.eq.s32.totalorder %s18, 1
      %p36 = por %p34, %p35
      %p37 = scmp.ne.s32.totalorder %s26, %s27
      %p38 = scmp.eq.s32.totalorder %s18, 0
      %p39 = por %p37, %p38
      %p40 = scmp.ne.s32.totalorder %s26, %s27
      %p41 = scmp.eq.s32.totalorder %s19, 1
      %p42 = por %p40, %p41
      %p44 = scmp.ne.s32.totalorder %s27, %s43
      %p45 = scmp.eq.s32.totalorder %s19, 0
      %p46 = por %p44, %p45
      %s47 = ssub.s32 %s13, %s20
      %p48 = scmp.eq.s32.totalorder %s47, 0
      %s50 = sadd.s32 %s49, 1
      %s51 = scalar_select %p48, %s49, %s50
      %p54 = pneg %p48
      %p55 = scmp.eq.s32.totalorder %s13, 1
      %p56 = por %p54, %p55
      %p57 = scmp.ne.s32.totalorder %s49, %s52
      %p58 = scmp.eq.s32.totalorder %s13, 0
      %p59 = por %p57, %p58
      %p60 = scmp.ne.s32.totalorder %s49, %s52
      %p61 = scmp.eq.s32.totalorder %s18, 1
      %p62 = por %p60, %p61
      %p63 = scmp.ne.s32.totalorder %s52, %s53
      %p64 = scmp.eq.s32.totalorder %s18, 0
      %p65 = por %p63, %p64
      %p66 = scmp.ne.s32.totalorder %s52, %s53
      %p67 = scmp.eq.s32.totalorder %s19, 1
      %p68 = por %p66, %p67
      %p70 = scmp.ne.s32.totalorder %s53, %s69
      %p71 = scmp.eq.s32.totalorder %s19, 0
      %p72 = por %p70, %p71
      %s74 = sadd.s32 %s73, 1
      %p77 = scmp.eq.s32.totalorder %s13, 1
      %p78 = scmp.ne.s32.totalorder %s73, %s75
      %p79 = scmp.eq.s32.totalorder %s13, 0
      %p80 = por %p78, %p79
      %p81 = scmp.ne.s32.totalorder %s73, %s75
      %p82 = scmp.eq.s32.totalorder %s18, 1
      %p83 = por %p81, %p82
      %p84 = scmp.ne.s32.totalorder %s75, %s76
      %p85 = scmp.eq.s32.totalorder %s18, 0
      %p86 = por %p84, %p85
      %p87 = scmp.ne.s32.totalorder %s75, %s76
      %p88 = scmp.eq.s32.totalorder %s19, 1
      %p89 = por %p87, %p88
      %p91 = scmp.ne.s32.totalorder %s76, %s90
      %p92 = scmp.eq.s32.totalorder %s19, 0
      %p93 = por %p91, %p92
      %s95 = sadd.s32 %s94, 1
      %p98 = scmp.eq.s32.totalorder %s13, 1
      %p99 = scmp.ne.s32.totalorder %s94, %s96
      %p100 = scmp.eq.s32.totalorder %s13, 0
      %p101 = por %p99, %p100
      %p102 = scmp.ne.s32.totalorder %s94, %s96
      %p103 = scmp.eq.s32.totalorder %s18, 1
      %p104 = por %p102, %p103
      %p105 = scmp.ne.s32.totalorder %s96, %s97
      %p106 = scmp.eq.s32.totalorder %s18, 0
      %p107 = por %p105, %p106
      %p108 = scmp.ne.s32.totalorder %s96, %s97
      %p109 = scmp.eq.s32.totalorder %s19, 1
      %p110 = por %p108, %p109
      %p112 = scmp.ne.s32.totalorder %s97, %s111
      %p113 = scmp.eq.s32.totalorder %s19, 0
      %p114 = por %p112, %p113
      %s115 = ssub.s32 %s13, %s20
      %p116 = scmp.eq.s32.totalorder %s115, 0
      %s118 = sadd.s32 %s117, 1
      %s119 = scalar_select %p116, %s117, %s118
      %p122 = pneg %p116
      %p123 = scmp.eq.s32.totalorder %s13, 1
      %p124 = por %p122, %p123
      %p125 = scmp.ne.s32.totalorder %s117, %s120
      %p126 = scmp.eq.s32.totalorder %s13, 0
      %p127 = por %p125, %p126
      %p128 = scmp.ne.s32.totalorder %s117, %s120
      %p129 = scmp.eq.s32.totalorder %s18, 1
      %p130 = por %p128, %p129
      %p131 = scmp.ne.s32.totalorder %s120, %s121
      %p132 = scmp.eq.s32.totalorder %s18, 0
      %p133 = por %p131, %p132
      %p134 = scmp.ne.s32.totalorder %s120, %s121
      %p135 = scmp.eq.s32.totalorder %s19, 1
      %p136 = por %p134, %p135
      %p138 = scmp.ne.s32.totalorder %s121, %s137
      %p139 = scmp.eq.s32.totalorder %s19, 0
      %p140 = por %p138, %p139
      %p141 = scmp.le.s32.totalorder 1, %s13
      %p142 = scmp.lt.s32.totalorder %s13, 3
      %p143 = pnand %p141, %p142
      %p144 = pneg %p143
      // Predicated region
      $region9: #{highway_gate.1} parent=5 // pred_check
        _
      $region10: #{highway_gate.1} parent=5 // pred_check_branch
        %146 = sbr.rel (%p143) target = $region12
      $region11: #{highway_gate.1} parent=5 // pred_region
        %s147 = ssub.s32 %s13, 1
        // Predicated region
        $region13: #{highway_gate.1} parent=11 // pred_check
          %p148 = pneg %p86
        $region14: #{highway_gate.1} parent=11 // pred_check_branch
          %150 = sbr.rel (%p148) target = $region16
        $region15: #{highway_gate.1} parent=11 // pred_region
          _
        $region16: #{highway_gate.1} parent=11 // pred_fallthru
          _
        // Predicated region
        $region17: #{highway_gate.1} parent=11 // pred_check
          %p151 = pneg %p107
        $region18: #{highway_gate.1} parent=11 // pred_check_branch
          %153 = sbr.rel (%p151) target = $region20
        $region19: #{highway_gate.1} parent=11 // pred_region
          _
        $region20: #{highway_gate.1} parent=11 // pred_fallthru
          _
      $region12: #{highway_gate.1} parent=5 // pred_fallthru
        _
      %p154 = scmp.lt.s32.totalorder %s13, 2
      // Predicated region
      $region21: #{highway_gate.1} parent=5 // pred_check
        %p155 = pneg %p154
      $region22: #{highway_gate.1} parent=5 // pred_check_branch
        %157 = sbr.rel (%p155) target = $region24
      $region23: #{highway_gate.1} parent=5 // pred_region
        // Predicated region
        $region25: #{highway_gate.1} parent=23 // pred_check
          %p158 = pneg %p33
        $region26: #{highway_gate.1} parent=23 // pred_check_branch
          %160 = sbr.rel (%p158) target = $region28
        $region27: #{highway_gate.1} parent=23 // pred_region
          %p161 = scmp.lt.s32.totalorder %s13, 1
          %s162 = scalar_select %p161, %s13, 1
          %s163 = smul.addr %s162, 8
          %s164 = scalar_lea.vmem %s0, %s163
        $region28: #{highway_gate.1} parent=23 // pred_fallthru
          _
        // Predicated region
        $region29: #{highway_gate.1} parent=23 // pred_check
          %p165 = pneg %p59
        $region30: #{highway_gate.1} parent=23 // pred_check_branch
          %167 = sbr.rel (%p165) target = $region32
        $region31: #{highway_gate.1} parent=23 // pred_region
          %p168 = scmp.lt.s32.totalorder %s13, 1
          %s169 = scalar_select %p168, %s13, 1
          %s170 = smul.addr %s169, 8
          %s171 = scalar_lea.vmem %s1, %s170
        $region32: #{highway_gate.1} parent=23 // pred_fallthru
          _
      $region24: #{highway_gate.1} parent=5 // pred_fallthru
        _
      %p172 = scmp.le.s32.totalorder 1, %s13
      %p173 = scmp.lt.s32.totalorder %s13, 3
      %p174 = pnand %p172, %p173
      %p175 = pneg %p174
      // Predicated region
      $region33: #{highway_gate.1} parent=5 // pred_check
        _
      $region34: #{highway_gate.1} parent=5 // pred_check_branch
        %177 = sbr.rel (%p174) target = $region36
      $region35: #{highway_gate.1} parent=5 // pred_region
        %s178 = ssub.s32 %s13, 1
        %p179 = scmp.lt.s32.totalorder %s18, 1
        %s180 = scalar_select %p179, %s18, 1
        %s181 = smul.addr %s180, 8
        %s182 = scalar_lea.vmem %s0, %s181
        %p183 = pneg %p39
        %p184 = pneg %p36
        %p185 = scmp.lt.s32.totalorder %s18, 1
        %s186 = scalar_select %p185, %s18, 1
        %s187 = smul.addr %s186, 8
        %s188 = scalar_lea.vmem %s1, %s187
        %p189 = pneg %p65
        %p190 = pneg %p62
        %p191 = pneg %p86
        %p192 = pneg %p83
        %p193 = pneg %p107
        %p194 = pneg %p104
        %p195 = pneg %p133
        %p196 = pneg %p130
        %s197 = sand.u32 %s120, 1
        %s198 = scalar_lea.sflag [#allocation3], %s197
        %s199 = sand.u32 %s120, 1
        %s200 = smul.addr %s199, 8
        %s201 = scalar_lea.vmem [#allocation2], %s200
        %p202 = scmp.lt.s32.totalorder %s18, 1
        %s203 = scalar_select %p202, %s18, 1
        %s204 = smul.addr %s203, 8
        %s205 = scalar_lea.vmem %s0, %s204
        %p206 = scmp.lt.s32.totalorder %s18, 1
        %s207 = scalar_select %p206, %s18, 1
        %s208 = smul.addr %s207, 8
        %s209 = scalar_lea.vmem %s1, %s208
        %v210 = vld [vmem:[%s205] sm:$0xff]
        %v211 = vld [vmem:[%s209] sm:$0xff]
        %v212 = vld [vmem:[%s2] sm:$0xff]
        %v213 = vld [vmem:[%s2 + $0x8] sm:$0xff]
        %v214 = vld [vmem:[%s2 + $0x10] sm:$0xff]
        %v215 = vld [vmem:[%s2 + $0x18] sm:$0xff]
        %v216 = vld [vmem:[%s3] sm:$0x1]
        %v218 = vlaneseq
        %v219 = vshrl.u32 %v218, 7
        %v220 = vsub.s32 0, %v219
        %v221 = vrot.slane %v216, %v220
        %vm223 = vcmask 261120
        %v225 = vsel %vm223, %v210, 0
        %227 = vmatprep.subr.mxu0 0.0
        %228 = vmatpush1.msra.mxu0 %v212
        %229 = vmatprep.subr.mxu0 0.0
        %230 = vmatpush1.msra.mxu0 %v213
        %231 = vmatprep.subr.mxu0 0.0
        %232 = vmatpush1.msra.mxu0 %v214
        %233 = vmatprep.subr.mxu0 0.0
        %234 = vmatpush1.msra.mxu0 %v215
        %235 = vmatprep.subr.mxu0 0.0
        %236 = vmatpush1.msra.mxu0 0.0
        %237 = vmatprep.subr.mxu0 0.0
        %238 = vmatpush1.msra.mxu0 0.0
        %239 = vmatprep.subr.mxu0 0.0
        %240 = vmatpush1.msra.mxu0 0.0
        %241 = vmatprep.subr.mxu0 0.0
        %242 = vmatpush1.msra.mxu0 0.0
        %243 = vmatprep.subr.mxu0 0.0
        %244 = vmatpush1.msra.mxu0 0.0
        %245 = vmatprep.subr.mxu0 0.0
        %246 = vmatpush1.msra.mxu0 0.0
        %247 = vmatprep.subr.mxu0 0.0
        %248 = vmatpush1.msra.mxu0 0.0
        %249 = vmatprep.subr.mxu0 0.0
        %250 = vmatpush1.msra.mxu0 0.0
        %251 = vmatprep.subr.mxu0 0.0
        %252 = vmatpush1.msra.mxu0 0.0
        %253 = vmatprep.subr.mxu0 0.0
        %254 = vmatpush1.msra.mxu0 0.0
        %255 = vmatprep.subr.mxu0 0.0
        %256 = vmatpush1.msra.mxu0 0.0
        %257 = vmatprep.subr.mxu0 0.0
        %258 = vmatpush1.msra.mxu0 0.0
        %259 = vmatprep.subr.mxu0 0.0
        %260 = vmatpush1.msra.mxu0 0.0
        %261 = vmatprep.subr.mxu0 0.0
        %262 = vmatpush1.msra.mxu0 0.0
        %263 = vmatprep.subr.mxu0 0.0
        %264 = vmatpush1.msra.mxu0 0.0
        %265 = vmatprep.subr.mxu0 0.0
        %266 = vmatpush1.msra.mxu0 0.0
        %267 = vmatprep.subr.mxu0 0.0
        %268 = vmatpush1.msra.mxu0 0.0
        %269 = vmatprep.subr.mxu0 0.0
        %270 = vmatpush1.msra.mxu0 0.0
        %271 = vmatprep.subr.mxu0 0.0
        %272 = vmatpush1.msra.mxu0 0.0
        %273 = vmatprep.subr.mxu0 0.0
        %274 = vmatpush1.msra.mxu0 0.0
        %275 = vmatprep.subr.mxu0 0.0
        %276 = vmatpush1.msra.mxu0 0.0
        %277 = vmatprep.subr.mxu0 0.0
        %278 = vmatpush1.msra.mxu0 0.0
        %279 = vmatprep.subr.mxu0 0.0
        %280 = vmatpush1.msra.mxu0 0.0
        %281 = vmatprep.subr.mxu0 0.0
        %282 = vmatpush1.msra.mxu0 0.0
        %283 = vmatprep.subr.mxu0 0.0
        %284 = vmatpush1.msra.mxu0 0.0
        %285 = vmatprep.subr.mxu0 0.0
        %286 = vmatpush1.msra.mxu0 0.0
        %287 = vmatprep.subr.mxu0 0.0
        %288 = vmatpush1.msra.mxu0 0.0
        %289 = vmatprep.subr.mxu0 0.0
        %290 = vmatpush1.msra.mxu0 0.0
        %291 = vmatprep.mubr.f32.mxu0 0.0
        %292 = vmatmul.mubr.f32.gmra.mrb[0].mxu0 %v225
        %v293 = vpop.f32.mrb[0].mxu0
        %v294 = vadd.f32 %v221, %v293
        %v295 = vpop.f32.mrb[0].mxu0
        %296 = vdwg.mxu0
        %v297 = vxor.u32 %v294, 2147483648
        %v298 = vmul.f32 %v297, 1.442695
        %v299 = vpow.pop %v298
        %v300 = vadd.f32 %v299, 1.0
        %v301 = vrcp.pop %v300
        %v302 = vmul.f32 1.0, %v301
        %v303 = vsub.f32 %v210, %v211
        %v304 = vmul.f32 %v302, %v303
        %v305 = vadd.f32 %v211, %v304
        %306 = vst.msk [vmem:[%s201] sm:$0xff] %vm223, %v305
        %s307 = sand.u32 %s120, 1
        %s308 = scalar_lea.sflag [#allocation3], %s307
        %s309 = sand.u32 %s120, 1
        %s310 = smul.addr %s309, 8
        %s311 = scalar_lea.vmem [#allocation2], %s310
        // Predicated region
        $region37: #{highway_gate.1} parent=35 // pred_check
          %p312 = pneg %p130
        $region38: #{highway_gate.1} parent=35 // pred_check_branch
          %314 = sbr.rel (%p312) target = $region40
        $region39: #{highway_gate.1} parent=35 // pred_region
          %s316 = ssub.s32 128, 128
          %317 = vsyncadd %s308, %s316
          %s318 = smul.addr %s18, 128
          %s319 = scalar_lea.hbm %s4, %s318
          %s321 = sshll.u32 %s311, 4
          %s322 = int_to_ptr.vmem [resolvable:$true] %s321
          %324 = dma.vmem_to_hbm [thread:$0]  %s322, 128, %s319, %s308
        $region40: #{highway_gate.1} parent=35 // pred_fallthru
          _
      $region36: #{highway_gate.1} parent=5 // pred_fallthru
        _
      %p325 = scmp.le.s32.totalorder 2, %s13
      // Predicated region
      $region41: #{highway_gate.1} parent=5 // pred_check
        %p326 = pneg %p325
      $region42: #{highway_gate.1} parent=5 // pred_check_branch
        %328 = sbr.rel (%p326) target = $region44
      $region43: #{highway_gate.1} parent=5 // pred_region
        %s329 = ssub.s32 %s13, 2
        // Predicated region
        $region45: #{highway_gate.1} parent=43 // pred_check
          %p330 = pneg %p136
        $region46: #{highway_gate.1} parent=43 // pred_check_branch
          %332 = sbr.rel (%p330) target = $region48
        $region47: #{highway_gate.1} parent=43 // pred_region
          %s333 = sand.u32 %s121, 1
          %s334 = scalar_lea.sflag [#allocation3], %s333
          %s335 = sand.u32 %s121, 1
          %s336 = smul.addr %s335, 8
          %s337 = scalar_lea.vmem [#allocation2], %s336
          %338 = dma.done %s334, 128
        $region48: #{highway_gate.1} parent=43 // pred_fallthru
          _
      $region44: #{highway_gate.1} parent=5 // pred_fallthru
        _
    $region6: #{highway_gate.1} parent=1 // loop_footer
      %s17 = sadd.s32 1, %s13
    $region7: #{highway_gate.1} parent=1 // loop_footer_branch
      %12 = sbr.rel target = $region3
    $region8: #{highway_gate.1} parent=1 // loop_exit
      _
    %339 = vsyncpa [#allocation3], 1
    %s340 = scalar_lea.sflag [#allocation3], 1
    %341 = vsyncpa %s340, 1

</llo_original>
